<compile_context>
chip_gen: v6e
topology: v6e:2x2x1
jax: 0.10.0
libtpu: 0.0.40
codegen_flags: <defaults>
</compile_context>

<pallas_src>
import math
import functools

import jax
import jax.numpy as jnp
from jax.experimental import pallas as pl
from jax.experimental.pallas import tpu as pltpu


# ------------------------------ fused kernel --------------------------------

def _fused_step_kernel(*refs, n_layers, hidden_dim, n_modes):
    """One full decoder step: attention access + n_layers GRU + ctx + mode softmax."""
    last_state_ref, cur_in_ref, mem_ref, val_ref, wq_ref = refs[:5]
    gru_refs = refs[5:5 + 2 * n_layers]          # (W_l, b_l) per layer, block-structured
    wv_ref, bv_ref, out_ref = refs[5 + 2 * n_layers:]

    H = hidden_dim
    x_in = cur_in_ref[...]                                       # [B, I]
    B = x_in.shape[0]
    hs = [last_state_ref[l] for l in range(n_layers)]            # n_layers x [B, H]

    # ---- get_context: flatten state + append input (all in-kernel) ---------
    query = jnp.concatenate(hs + [x_in], axis=-1)                # [B, layers*H + I]

    # ---- memory agent access (MXU contractions, scale folded into Wq) ------
    proj = jnp.dot(query, wq_ref[...],
                   preferred_element_type=jnp.float32)           # [B, Md]
    scores = jnp.einsum('bqd,bld->bql', proj[:, None, :], mem_ref[...],
                        preferred_element_type=jnp.float32)      # [B, 1, L]
    scores = scores - jnp.max(scores, axis=-1, keepdims=True)
    p = jnp.exp(scores)
    attn = p * pl.reciprocal(jnp.sum(p, axis=-1, keepdims=True), approx=True)
    readout = jnp.einsum('bql,blv->bqv', attn, val_ref[...],
                         preferred_element_type=jnp.float32)[:, 0, :]   # [B, Vd]

    # ---- GRU stack: one MXU matmul per layer --------------------------------
    # weight columns: [ r(x,h) | z(x,h) | i_n(x only) | h_n(h only) ]  (4H = 128)
    x = jnp.concatenate([x_in, readout], axis=-1)                # decoder_input_state
    new_hs = []
    for l in range(n_layers):
        w_ref, b_ref = gru_refs[2 * l], gru_refs[2 * l + 1]
        xh = jnp.concatenate([x, hs[l]], axis=-1)                # [B, in_l + H]
        g = jnp.dot(xh, w_ref[...],
                    preferred_element_type=jnp.float32) + b_ref[...]   # [B, 4H]
        r = jax.nn.sigmoid(g[:, :H])
        z = jax.nn.sigmoid(g[:, H:2 * H])
        n = jnp.tanh(g[:, 2 * H:3 * H] + r * g[:, 3 * H:4 * H])
        h_new = (1.0 - z) * n + z * hs[l]
        new_hs.append(h_new)
        x = h_new

    # ---- get_memory_context + vocab mode predictor + softmax ----------------
    ctx = jnp.concatenate([readout] + new_hs + [x_in], axis=-1)  # [B, Cd] (=128 here)
    logits = jnp.dot(ctx, wv_ref[...],
                     preferred_element_type=jnp.float32) + bv_ref[...]  # [B, n_modes]
    logits = logits - jnp.max(logits, axis=-1, keepdims=True)
    e = jnp.exp(logits)
    prob = e * pl.reciprocal(jnp.sum(e, axis=-1, keepdims=True), approx=True)

    # ---- single lane-dense output slab: [ctx | prob | zero-pad] -------------
    pad_w = out_ref.shape[-1] - ctx.shape[-1] - n_modes
    pad = jnp.zeros((B, pad_w), jnp.float32)
    out_ref[...] = jnp.concatenate([ctx, prob, pad], axis=-1)


_VMEM_SPEC = pl.BlockSpec(memory_space=pltpu.MemorySpace.VMEM)


# ----------------------------- module wrapper --------------------------------

class StepwiseDecoderBasePallas:
    """JAX/Pallas port of StepwiseDecoderBase (prediction_context='extend_full',
    one attention memory agent, n_layers GRU)."""

    def __init__(self, key, *, n_layers=2, hidden_dim=32, input_dim=32,
                 mem_dim=32, value_dim=32, n_modes=8):
        self.prediction_context = 'extend_full'
        self.n_layers = n_layers
        self.hidden_dim = hidden_dim
        self.input_dim = input_dim
        self.mem_dim = mem_dim
        self.value_dim = value_dim
        self.n_modes = n_modes

        self.query_dim = n_layers * hidden_dim + input_dim            # get_context
        self.ctx_dim = value_dim + n_layers * hidden_dim + input_dim  # get_memory_context
        # packed output slab width: next multiple of 128 >= ctx + prob
        self.out_width = ((self.ctx_dim + n_modes + 127) // 128) * 128

        H = hidden_dim
        ks = jax.random.split(key, 4 * n_layers + 2)

        def init(k, shape, fan_in):
            return jax.random.normal(k, shape, jnp.float32) / math.sqrt(fan_in)

        # memory agent query projection, with 1/sqrt(mem_dim) attention scale folded in
        self.Wq = init(ks[0], (self.query_dim, mem_dim), self.query_dim) / math.sqrt(mem_dim)

        # GRU parameters (PyTorch layout: gates ordered r, z, n)
        in_dims = [input_dim + value_dim] + [hidden_dim] * (n_layers - 1)
        self.W_ih, self.W_hh, self.b_ih, self.b_hh = [], [], [], []
        idx = 1
        for l in range(n_layers):
            self.W_ih.append(init(ks[idx + 0], (in_dims[l], 3 * H), in_dims[l]))
            self.W_hh.append(init(ks[idx + 1], (H, 3 * H), H))
            self.b_ih.append(init(ks[idx + 2], (1, 3 * H), H))
            self.b_hh.append(init(ks[idx + 3], (1, 3 * H), H))
            idx += 4

        kw, kb = jax.random.split(ks[idx])
        self.Wv = init(kw, (self.ctx_dim, n_modes), self.ctx_dim)
        self.bv = init(kb, (1, n_modes), self.ctx_dim)

        # Pre-fuse GRU weights into one block-structured matmul per layer:
        #   [x | h] @ W_l -> [ r_combined | z_combined | i_n | h_n ]   (width 4H)
        self.W_gru, self.b_gru = [], []
        for l in range(n_layers):
            Wih, Whh = self.W_ih[l], self.W_hh[l]
            top = jnp.concatenate(
                [Wih[:, :2 * H], Wih[:, 2 * H:], jnp.zeros((Wih.shape[0], H), jnp.float32)],
                axis=-1)                                               # x rows
            bot = jnp.concatenate(
                [Whh[:, :2 * H], jnp.zeros((H, H), jnp.float32), Whh[:, 2 * H:]],
                axis=-1)                                               # h rows
            self.W_gru.append(jnp.concatenate([top, bot], axis=0))     # [in_l + H, 4H]
            self.b_gru.append(jnp.concatenate(
                [self.b_ih[l][:, :2 * H] + self.b_hh[l][:, :2 * H],
                 self.b_ih[l][:, 2 * H:], self.b_hh[l][:, 2 * H:]], axis=-1))  # [1, 4H]

        self._step_jit = jax.jit(self._step_impl)

    # ---- one fused decode step ----------------------------------------------
    def _step_impl(self, last_state, current_input, memory_bank, memory_value):
        B = current_input.shape[0]
        kernel = functools.partial(
            _fused_step_kernel,
            n_layers=self.n_layers, hidden_dim=self.hidden_dim, n_modes=self.n_modes)

        args = [last_state, current_input, memory_bank, memory_value, self.Wq]
        for l in range(self.n_layers):
            args += [self.W_gru[l], self.b_gru[l]]
        args += [self.Wv, self.bv]

        slab = pl.pallas_call(
            kernel,
            out_shape=jax.ShapeDtypeStruct((B, self.out_width), jnp.float32),
            in_specs=[_VMEM_SPEC] * len(args),
            out_specs=_VMEM_SPEC,
        )(*args)

        # unpack the lane-dense slab:  [ readout | h_0 ... h_{L-1} | input | prob | pad ]
        H, V = self.hidden_dim, self.value_dim
        ctx = slab[:, :self.ctx_dim]
        prob = slab[:, self.ctx_dim:self.ctx_dim + self.n_modes]
        hs = [slab[:, V + l * H: V + (l + 1) * H] for l in range(self.n_layers)]
        new_state = jnp.stack(hs, axis=0)                 # [layers, batch, hidden]
        decoder_output = hs[-1][None]                     # [1, batch, hidden]
        return decoder_output, new_state, ctx, prob

    def step(self, last_state, current_input, memory_bank, memory_value):
        return self._step_jit(last_state, current_input, memory_bank, memory_value)


# --------------------------- pure-JAX reference ------------------------------

def reference_step(m, last_state, current_input, memory_bank, memory_value):
    flat = jnp.transpose(last_state, (1, 0, 2)).reshape(last_state.shape[1], -1)
    query = jnp.concatenate([flat, current_input], axis=-1)
    proj = query @ m.Wq                                        # scale folded into Wq
    scores = jnp.einsum('bd,bld->bl', proj, memory_bank)
    attn = jax.nn.softmax(scores, axis=-1)
    readout = jnp.einsum('bl,blv->bv', attn, memory_value)
    x = jnp.concatenate([current_input, readout], axis=-1)
    H = m.hidden_dim
    new_states = []
    for l in range(m.n_layers):
        h = last_state[l]
        gi = x @ m.W_ih[l] + m.b_ih[l]
        gh = h @ m.W_hh[l] + m.b_hh[l]
        r = jax.nn.sigmoid(gi[:, :H] + gh[:, :H])
        z = jax.nn.sigmoid(gi[:, H:2 * H] + gh[:, H:2 * H])
        n = jnp.tanh(gi[:, 2 * H:] + r * gh[:, 2 * H:])
        h = (1 - z) * n + z * h
        new_states.append(h)
        x = h
    new_state = jnp.stack(new_states, axis=0)
    flat_new = jnp.transpose(new_state, (1, 0, 2)).reshape(new_state.shape[1], -1)
    ctx = jnp.concatenate([readout, flat_new, current_input], axis=-1)
    prob = jax.nn.softmax(ctx @ m.Wv + m.bv, axis=-1)
    return x[None], new_state, ctx, prob


# --------------------------------- main ---------------------------------------

if __name__ == "__main__":
    key = jax.random.PRNGKey(0)
    k_param, k_state, k_inp, k_mem, k_val = jax.random.split(key, 5)

    batch, layers, hidden, inp_dim, mem_len, mem_dim, val_dim = 2, 2, 32, 32, 8, 32, 32

    module = StepwiseDecoderBasePallas(
        k_param, n_layers=layers, hidden_dim=hidden, input_dim=inp_dim,
        mem_dim=mem_dim, value_dim=val_dim, n_modes=8)

    last_state = jax.random.normal(k_state, (layers, batch, hidden), jnp.float32)
    current_input = jax.random.normal(k_inp, (batch, inp_dim), jnp.float32)
    memory_bank = jax.random.normal(k_mem, (batch, mem_len, mem_dim), jnp.float32)
    memory_value = jax.random.normal(k_val, (batch, mem_len, val_dim), jnp.float32)

    dec_out, new_state, ctx, prob = module.step(
        last_state, current_input, memory_bank, memory_value)
    jax.block_until_ready((dec_out, new_state, ctx, prob))

    # verify against pure-JAX reference (tolerance covers pl.reciprocal(approx=True))
    r_out, r_state, r_ctx, r_prob = reference_step(
        module, last_state, current_input, memory_bank, memory_value)
    assert jnp.allclose(dec_out, r_out, atol=1e-2), "decoder output mismatch"
    assert jnp.allclose(new_state, r_state, atol=1e-2), "state mismatch"
    assert jnp.allclose(ctx, r_ctx, atol=1e-2), "context mismatch"
    assert jnp.allclose(prob, r_prob, atol=1e-2), "prob dist mismatch"

    print("KERNEL_OK")
</pallas_src>

<mosaic_0001>
module attributes {stable_mosaic.version = 11 : i64} {
  func.func @_fused_step_kernel(%arg0: memref<2x2x32xf32, #tpu.memory_space<vmem>>, %arg1: memref<2x32xf32, #tpu.memory_space<vmem>>, %arg2: memref<2x8x32xf32, #tpu.memory_space<vmem>>, %arg3: memref<2x8x32xf32, #tpu.memory_space<vmem>>, %arg4: memref<96x32xf32, #tpu.memory_space<vmem>>, %arg5: memref<96x128xf32, #tpu.memory_space<vmem>>, %arg6: memref<1x128xf32, #tpu.memory_space<vmem>>, %arg7: memref<64x128xf32, #tpu.memory_space<vmem>>, %arg8: memref<1x128xf32, #tpu.memory_space<vmem>>, %arg9: memref<128x8xf32, #tpu.memory_space<vmem>>, %arg10: memref<1x8xf32, #tpu.memory_space<vmem>>, %arg11: memref<2x256xf32, #tpu.memory_space<vmem>>) attributes {dimension_semantics = [], scalar_prefetch = 0 : i64, scratch_operands = 0 : i64, tpu.core_type = #tpu.core_type<tc>} {
    %c0 = arith.constant 0 : index
    %c0_0 = arith.constant 0 : index
    %0 = vector.load %arg1[%c0, %c0_0] : memref<2x32xf32, #tpu.memory_space<vmem>>, vector<2x32xf32>
    %c0_1 = arith.constant 0 : index
    %c0_2 = arith.constant 0 : index
    %c0_3 = arith.constant 0 : index
    %1 = vector.load %arg0[%c0_1, %c0_2, %c0_3] : memref<2x2x32xf32, #tpu.memory_space<vmem>>, vector<1x2x32xf32>
    %2 = vector.shape_cast %1 : vector<1x2x32xf32> to vector<2x32xf32>
    %c1 = arith.constant 1 : index
    %c0_4 = arith.constant 0 : index
    %c0_5 = arith.constant 0 : index
    %3 = vector.load %arg0[%c1, %c0_4, %c0_5] : memref<2x2x32xf32, #tpu.memory_space<vmem>>, vector<1x2x32xf32>
    %4 = vector.shape_cast %3 : vector<1x2x32xf32> to vector<2x32xf32>
    %5 = tpu.concatenate %2, %4, %0 in 1 : vector<2x32xf32>, vector<2x32xf32>, vector<2x32xf32> -> vector<2x96xf32>
    %c0_6 = arith.constant 0 : index
    %c0_7 = arith.constant 0 : index
    %6 = vector.load %arg4[%c0_6, %c0_7] : memref<96x32xf32, #tpu.memory_space<vmem>>, vector<96x32xf32>
    %cst = arith.constant dense<0.000000e+00> : vector<2x32xf32>
    %7 = tpu.matmul %5, %6, %cst {dimension_numbers = #tpu.dot_dimension_numbers<[1], [0], [0], [1], [0, 0, 1, 1], [], []>} : vector<2x96xf32>, vector<96x32xf32>, vector<2x32xf32> -> vector<2x32xf32>
    %8 = vector.shape_cast %7 : vector<2x32xf32> to vector<2x1x32xf32>
    %c0_8 = arith.constant 0 : index
    %c0_9 = arith.constant 0 : index
    %c0_10 = arith.constant 0 : index
    %9 = vector.load %arg2[%c0_8, %c0_9, %c0_10] : memref<2x8x32xf32, #tpu.memory_space<vmem>>, vector<2x8x32xf32>
    "tpu.trace_start"() <{level = 10 : i32, message = "bqd,bld->bql"}> : () -> ()
    %cst_11 = arith.constant dense<0.000000e+00> : vector<2x1x8xf32>
    %10 = tpu.matmul %8, %9, %cst_11 {dimension_numbers = #tpu.dot_dimension_numbers<[2], [2], [1], [1], [0, 0, 0, 1, 1, 1], [0], [0]>} : vector<2x1x32xf32>, vector<2x8x32xf32>, vector<2x1x8xf32> -> vector<2x1x8xf32>
    "tpu.trace_stop"() : () -> ()
    %cst_12 = arith.constant dense<0xFF800000> : vector<2x1xf32>
    %11 = vector.multi_reduction <maximumf>, %10, %cst_12 [2] : vector<2x1x8xf32> to vector<2x1xf32>
    %12 = vector.shape_cast %11 : vector<2x1xf32> to vector<2x1x1xf32>
    %13 = vector.broadcast %12 : vector<2x1x1xf32> to vector<2x1x8xf32>
    %14 = arith.subf %10, %13 : vector<2x1x8xf32>
    %15 = math.exp %14 : vector<2x1x8xf32>
    %cst_13 = arith.constant dense<0.000000e+00> : vector<2x1xf32>
    %16 = vector.multi_reduction <add>, %15, %cst_13 [2] : vector<2x1x8xf32> to vector<2x1xf32>
    %17 = vector.shape_cast %16 : vector<2x1xf32> to vector<2x1x1xf32>
    %18 = tpu.reciprocal %17 {approx = true} : vector<2x1x1xf32> -> vector<2x1x1xf32>
    %19 = vector.broadcast %18 : vector<2x1x1xf32> to vector<2x1x8xf32>
    %20 = arith.mulf %15, %19 : vector<2x1x8xf32>
    %c0_14 = arith.constant 0 : index
    %c0_15 = arith.constant 0 : index
    %c0_16 = arith.constant 0 : index
    %21 = vector.load %arg3[%c0_14, %c0_15, %c0_16] : memref<2x8x32xf32, #tpu.memory_space<vmem>>, vector<2x8x32xf32>
    "tpu.trace_start"() <{level = 10 : i32, message = "bql,blv->bqv"}> : () -> ()
    %cst_17 = arith.constant dense<0.000000e+00> : vector<2x1x32xf32>
    %22 = tpu.matmul %20, %21, %cst_17 {dimension_numbers = #tpu.dot_dimension_numbers<[2], [1], [1], [2], [0, 0, 0, 1, 1, 2], [0], [0]>} : vector<2x1x8xf32>, vector<2x8x32xf32>, vector<2x1x32xf32> -> vector<2x1x32xf32>
    "tpu.trace_stop"() : () -> ()
    %23 = vector.shape_cast %22 : vector<2x1x32xf32> to vector<2x32xf32>
    %24 = tpu.concatenate %0, %23 in 1 : vector<2x32xf32>, vector<2x32xf32> -> vector<2x64xf32>
    %25 = tpu.concatenate %24, %2 in 1 : vector<2x64xf32>, vector<2x32xf32> -> vector<2x96xf32>
    %c0_18 = arith.constant 0 : index
    %c0_19 = arith.constant 0 : index
    %26 = vector.load %arg5[%c0_18, %c0_19] : memref<96x128xf32, #tpu.memory_space<vmem>>, vector<96x128xf32>
    %cst_20 = arith.constant dense<0.000000e+00> : vector<2x128xf32>
    %27 = tpu.matmul %25, %26, %cst_20 {dimension_numbers = #tpu.dot_dimension_numbers<[1], [0], [0], [1], [0, 0, 1, 1], [], []>} : vector<2x96xf32>, vector<96x128xf32>, vector<2x128xf32> -> vector<2x128xf32>
    %c0_21 = arith.constant 0 : index
    %c0_22 = arith.constant 0 : index
    %28 = vector.load %arg6[%c0_21, %c0_22] : memref<1x128xf32, #tpu.memory_space<vmem>>, vector<1x128xf32>
    %29 = vector.broadcast %28 : vector<1x128xf32> to vector<2x128xf32>
    %30 = arith.addf %27, %29 : vector<2x128xf32>
    %31 = vector.extract_strided_slice %30 {offsets = [0, 0], sizes = [2, 32], strides = [1, 1]} : vector<2x128xf32> to vector<2x32xf32>
    %32 = arith.negf %31 : vector<2x32xf32>
    %33 = math.exp %32 : vector<2x32xf32>
    %cst_23 = arith.constant 1.000000e+00 : f32
    %34 = vector.broadcast %cst_23 : f32 to vector<2x32xf32>
    %35 = arith.addf %34, %33 : vector<2x32xf32>
    %36 = arith.divf %34, %35 : vector<2x32xf32>
    %37 = vector.extract_strided_slice %30 {offsets = [0, 32], sizes = [2, 32], strides = [1, 1]} : vector<2x128xf32> to vector<2x32xf32>
    %38 = arith.negf %37 : vector<2x32xf32>
    %39 = math.exp %38 : vector<2x32xf32>
    %cst_24 = arith.constant 1.000000e+00 : f32
    %40 = vector.broadcast %cst_24 : f32 to vector<2x32xf32>
    %41 = arith.addf %40, %39 : vector<2x32xf32>
    %42 = arith.divf %40, %41 : vector<2x32xf32>
    %43 = vector.extract_strided_slice %30 {offsets = [0, 64], sizes = [2, 32], strides = [1, 1]} : vector<2x128xf32> to vector<2x32xf32>
    %44 = vector.extract_strided_slice %30 {offsets = [0, 96], sizes = [2, 32], strides = [1, 1]} : vector<2x128xf32> to vector<2x32xf32>
    %45 = arith.mulf %36, %44 : vector<2x32xf32>
    %46 = arith.addf %43, %45 : vector<2x32xf32>
    %47 = math.tanh %46 : vector<2x32xf32>
    %cst_25 = arith.constant 1.000000e+00 : f32
    %48 = vector.broadcast %cst_25 : f32 to vector<2x32xf32>
    %49 = arith.subf %48, %42 : vector<2x32xf32>
    %50 = arith.mulf %49, %47 : vector<2x32xf32>
    %51 = arith.mulf %42, %2 : vector<2x32xf32>
    %52 = arith.addf %50, %51 : vector<2x32xf32>
    %53 = tpu.concatenate %52, %4 in 1 : vector<2x32xf32>, vector<2x32xf32> -> vector<2x64xf32>
    %c0_26 = arith.constant 0 : index
    %c0_27 = arith.constant 0 : index
    %54 = vector.load %arg7[%c0_26, %c0_27] : memref<64x128xf32, #tpu.memory_space<vmem>>, vector<64x128xf32>
    %cst_28 = arith.constant dense<0.000000e+00> : vector<2x128xf32>
    %55 = tpu.matmul %53, %54, %cst_28 {dimension_numbers = #tpu.dot_dimension_numbers<[1], [0], [0], [1], [0, 0, 1, 1], [], []>} : vector<2x64xf32>, vector<64x128xf32>, vector<2x128xf32> -> vector<2x128xf32>
    %c0_29 = arith.constant 0 : index
    %c0_30 = arith.constant 0 : index
    %56 = vector.load %arg8[%c0_29, %c0_30] : memref<1x128xf32, #tpu.memory_space<vmem>>, vector<1x128xf32>
    %57 = vector.broadcast %56 : vector<1x128xf32> to vector<2x128xf32>
    %58 = arith.addf %55, %57 : vector<2x128xf32>
    %59 = vector.extract_strided_slice %58 {offsets = [0, 0], sizes = [2, 32], strides = [1, 1]} : vector<2x128xf32> to vector<2x32xf32>
    %60 = arith.negf %59 : vector<2x32xf32>
    %61 = math.exp %60 : vector<2x32xf32>
    %cst_31 = arith.constant 1.000000e+00 : f32
    %62 = vector.broadcast %cst_31 : f32 to vector<2x32xf32>
    %63 = arith.addf %62, %61 : vector<2x32xf32>
    %64 = arith.divf %62, %63 : vector<2x32xf32>
    %65 = vector.extract_strided_slice %58 {offsets = [0, 32], sizes = [2, 32], strides = [1, 1]} : vector<2x128xf32> to vector<2x32xf32>
    %66 = arith.negf %65 : vector<2x32xf32>
    %67 = math.exp %66 : vector<2x32xf32>
    %cst_32 = arith.constant 1.000000e+00 : f32
    %68 = vector.broadcast %cst_32 : f32 to vector<2x32xf32>
    %69 = arith.addf %68, %67 : vector<2x32xf32>
    %70 = arith.divf %68, %69 : vector<2x32xf32>
    %71 = vector.extract_strided_slice %58 {offsets = [0, 64], sizes = [2, 32], strides = [1, 1]} : vector<2x128xf32> to vector<2x32xf32>
    %72 = vector.extract_strided_slice %58 {offsets = [0, 96], sizes = [2, 32], strides = [1, 1]} : vector<2x128xf32> to vector<2x32xf32>
    %73 = arith.mulf %64, %72 : vector<2x32xf32>
    %74 = arith.addf %71, %73 : vector<2x32xf32>
    %75 = math.tanh %74 : vector<2x32xf32>
    %cst_33 = arith.constant 1.000000e+00 : f32
    %76 = vector.broadcast %cst_33 : f32 to vector<2x32xf32>
    %77 = arith.subf %76, %70 : vector<2x32xf32>
    %78 = arith.mulf %77, %75 : vector<2x32xf32>
    %79 = arith.mulf %70, %4 : vector<2x32xf32>
    %80 = arith.addf %78, %79 : vector<2x32xf32>
    %81 = tpu.concatenate %23, %52, %80, %0 in 1 : vector<2x32xf32>, vector<2x32xf32>, vector<2x32xf32>, vector<2x32xf32> -> vector<2x128xf32>
    %c0_34 = arith.constant 0 : index
    %c0_35 = arith.constant 0 : index
    %82 = vector.load %arg9[%c0_34, %c0_35] : memref<128x8xf32, #tpu.memory_space<vmem>>, vector<128x8xf32>
    %cst_36 = arith.constant dense<0.000000e+00> : vector<2x8xf32>
    %83 = tpu.matmul %81, %82, %cst_36 {dimension_numbers = #tpu.dot_dimension_numbers<[1], [0], [0], [1], [0, 0, 1, 1], [], []>} : vector<2x128xf32>, vector<128x8xf32>, vector<2x8xf32> -> vector<2x8xf32>
    %c0_37 = arith.constant 0 : index
    %c0_38 = arith.constant 0 : index
    %84 = vector.load %arg10[%c0_37, %c0_38] : memref<1x8xf32, #tpu.memory_space<vmem>>, vector<1x8xf32>
    %85 = vector.broadcast %84 : vector<1x8xf32> to vector<2x8xf32>
    %86 = arith.addf %83, %85 : vector<2x8xf32>
    %cst_39 = arith.constant dense<0xFF800000> : vector<2xf32>
    %87 = vector.multi_reduction <maximumf>, %86, %cst_39 [1] : vector<2x8xf32> to vector<2xf32>
    %88 = vector.shape_cast %87 : vector<2xf32> to vector<2x1xf32>
    %89 = vector.broadcast %88 : vector<2x1xf32> to vector<2x8xf32>
    %90 = arith.subf %86, %89 : vector<2x8xf32>
    %91 = math.exp %90 : vector<2x8xf32>
    %cst_40 = arith.constant dense<0.000000e+00> : vector<2xf32>
    %92 = vector.multi_reduction <add>, %91, %cst_40 [1] : vector<2x8xf32> to vector<2xf32>
    %93 = vector.shape_cast %92 : vector<2xf32> to vector<2x1xf32>
    %94 = tpu.reciprocal %93 {approx = true} : vector<2x1xf32> -> vector<2x1xf32>
    %95 = vector.broadcast %94 : vector<2x1xf32> to vector<2x8xf32>
    %96 = arith.mulf %91, %95 : vector<2x8xf32>
    %cst_41 = arith.constant 0.000000e+00 : f32
    %97 = vector.broadcast %cst_41 : f32 to vector<2x120xf32>
    %98 = tpu.concatenate %81, %96, %97 in 1 : vector<2x128xf32>, vector<2x8xf32>, vector<2x120xf32> -> vector<2x256xf32>
    %c0_42 = arith.constant 0 : index
    %c0_43 = arith.constant 0 : index
    %99 = vector.load %arg11[%c0_42, %c0_43] : memref<2x256xf32, #tpu.memory_space<vmem>>, vector<2x256xf32>
    tpu.vector_store %arg11[%c0_42, %c0_43], %98 {strides = array<i32>} : memref<2x256xf32, #tpu.memory_space<vmem>>, vector<2x256xf32>,
    return
  }
}

</mosaic_0001>

<llo_original>
// kernel: _step_impl.1
$region0: #{_step_impl.1}
  #allocation0 [shape = 'u32[]', space=smem, size = 0x4, offset = 0x4, fixed_abs, tag = 'smem constant byte address 0x4 - core index']
  #allocation1 [shape = 'u32[144,128]{1,0:T(1,128)}', space=vmem, size = 0x12000, scoped, tag = 'internal scratch']
  %s0 = inlined_call_operand.hbm [shape: f32[2,2,32], index: 0, kind: input, shape index: {}]
  %s1 = inlined_call_operand.hbm [shape: f32[2,32], index: 1, kind: input, shape index: {}]
  %s2 = inlined_call_operand.hbm [shape: f32[2,8,32], index: 2, kind: input, shape index: {}]
  %s3 = inlined_call_operand.hbm [shape: f32[2,8,32], index: 3, kind: input, shape index: {}]
  %s4 = inlined_call_operand.hbm [shape: f32[96,32], index: 4, kind: input, shape index: {}]
  %s5 = inlined_call_operand.hbm [shape: f32[96,128], index: 5, kind: input, shape index: {}]
  %s6 = inlined_call_operand.vmem [shape: f32[1,128], index: 6, kind: input, shape index: {}]
  %s7 = inlined_call_operand.hbm [shape: f32[64,128], index: 7, kind: input, shape index: {}]
  %s8 = inlined_call_operand.vmem [shape: f32[1,128], index: 8, kind: input, shape index: {}]
  %s9 = inlined_call_operand.hbm [shape: f32[128,8], index: 9, kind: input, shape index: {}]
  %s10 = inlined_call_operand.vmem [shape: f32[1,8], index: 10, kind: input, shape index: {}]
  %s11 = inlined_call_operand.vmem [shape: f32[2,256], index: 11, kind: output, shape index: {}]
  %s12 = sld [smem:[#allocation0]]
  $region86: #{_step_impl.1} parent=0
    _
  %s14 = ssub.s32 1, %s12
  %s15 = scalar_select 0, %s14, %s12
  $region1: #{_step_impl.1} parent=0
    #allocation2 [shape = 'u8[2048]{0}', space=vmem, size = 0x800, scoped, tag = 'input window, operand 0, single buffered']
    #allocation3 [shape = 's32[1]{0}', space=sflag, size = 0x4, scoped, tag = 'scoped memory for _step_impl.1']
    #allocation4 [shape = 'u8[1024]{0}', space=vmem, size = 0x400, scoped, tag = 'input window, operand 1, single buffered']
    #allocation5 [shape = 's32[1]{0}', space=sflag, size = 0x4, scoped, tag = 'scoped memory for _step_impl.1']
    #allocation6 [shape = 'u8[8192]{0}', space=vmem, size = 0x2000, scoped, tag = 'input window, operand 2, single buffered']
    #allocation7 [shape = 'u8[8192]{0}', space=vmem, size = 0x2000, scoped, tag = 'input window, operand 3, single buffered']
    #allocation8 [shape = 's32[1]{0}', space=sflag, size = 0x4, scoped, tag = 'scoped memory for _step_impl.1']
    #allocation9 [shape = 'u8[49152]{0}', space=vmem, size = 0xc000, scoped, tag = 'input window, operand 4, single buffered']
    #allocation10 [shape = 'u8[49152]{0}', space=vmem, size = 0xc000, scoped, tag = 'input window, operand 5, single buffered']
    #allocation11 [shape = 's32[1]{0}', space=sflag, size = 0x4, scoped, tag = 'scoped memory for _step_impl.1']
    #allocation12 [shape = 'u8[32768]{0}', space=vmem, size = 0x8000, scoped, tag = 'input window, operand 7, single buffered']
    #allocation13 [shape = 'u8[65536]{0}', space=vmem, size = 0x10000, scoped, tag = 'input window, operand 9, single buffered']
    #allocation14 [shape = 's32[1]{0}', space=sflag, size = 0x4, scoped, tag = 'scoped memory for _step_impl.1']
    %16 = vsyncpa [#allocation3], 0
    %17 = vsyncpa [#allocation5], 0
    %18 = vsyncpa [#allocation8], 0
    %19 = vsyncpa [#allocation11], 0
    %20 = vsyncpa [#allocation14], 0
    // Predicated region
    $region2: #{_step_impl.1} parent=1 // pred_check
      _
    $region3: #{_step_impl.1} parent=1 // pred_check_branch
      %22 = sbr.rel (0) target = $region5
    $region4: #{_step_impl.1} parent=1 // pred_region
      %s24 = ssub.s32 64, 64
      %25 = vsyncadd [#allocation3], %s24
      %s26 = sshll.u32 [#allocation2], 4
      %s27 = int_to_ptr.vmem [resolvable:$true] %s26
      %32 = dma.hbm_to_vmem [thread:$0]  %s0, 64, %s27, [#allocation3], 32, 32, 2
    $region5: #{_step_impl.1} parent=1 // pred_fallthru
      _
    // Predicated region
    $region6: #{_step_impl.1} parent=1 // pred_check
      _
    $region7: #{_step_impl.1} parent=1 // pred_check_branch
      %34 = sbr.rel (0) target = $region9
    $region8: #{_step_impl.1} parent=1 // pred_region
      %s36 = ssub.s32 32, 32
      %37 = vsyncadd [#allocation5], %s36
      %s39 = sshll.u32 [#allocation4], 4
      %s40 = int_to_ptr.vmem [resolvable:$true] %s39
      %42 = dma.hbm_to_vmem [thread:$0]  %s1, 32, %s40, [#allocation5]
    $region9: #{_step_impl.1} parent=1 // pred_fallthru
      _
    // Predicated region
    $region10: #{_step_impl.1} parent=1 // pred_check
      _
    $region11: #{_step_impl.1} parent=1 // pred_check_branch
      %44 = sbr.rel (0) target = $region13
    $region12: #{_step_impl.1} parent=1 // pred_region
      %s46 = ssub.s32 256, 256
      %47 = vsyncadd [#allocation5], %s46
      %s48 = sshll.u32 [#allocation6], 4
      %s49 = int_to_ptr.vmem [resolvable:$true] %s48
      %54 = dma.hbm_to_vmem [thread:$0]  %s2, 256, %s49, [#allocation5], 128, 128, 8
    $region13: #{_step_impl.1} parent=1 // pred_fallthru
      _
    // Predicated region
    $region14: #{_step_impl.1} parent=1 // pred_check
      _
    $region15: #{_step_impl.1} parent=1 // pred_check_branch
      %56 = sbr.rel (0) target = $region17
    $region16: #{_step_impl.1} parent=1 // pred_region
      %s58 = ssub.s32 256, 256
      %59 = vsyncadd [#allocation8], %s58
      %s60 = sshll.u32 [#allocation7], 4
      %s61 = int_to_ptr.vmem [resolvable:$true] %s60
      %66 = dma.hbm_to_vmem [thread:$0]  %s3, 256, %s61, [#allocation8], 128, 128, 8
    $region17: #{_step_impl.1} parent=1 // pred_fallthru
      _
    // Predicated region
    $region18: #{_step_impl.1} parent=1 // pred_check
      _
    $region19: #{_step_impl.1} parent=1 // pred_check_branch
      %68 = sbr.rel (0) target = $region21
    $region20: #{_step_impl.1} parent=1 // pred_region
      %s70 = ssub.s32 1536, 1536
      %71 = vsyncadd [#allocation8], %s70
      %s72 = sshll.u32 [#allocation9], 4
      %s73 = int_to_ptr.vmem [resolvable:$true] %s72
      %78 = dma.hbm_to_vmem [thread:$0]  %s4, 1536, %s73, [#allocation8], 128, 128, 8
    $region21: #{_step_impl.1} parent=1 // pred_fallthru
      _
    // Predicated region
    $region22: #{_step_impl.1} parent=1 // pred_check
      _
    $region23: #{_step_impl.1} parent=1 // pred_check_branch
      %80 = sbr.rel (0) target = $region25
    $region24: #{_step_impl.1} parent=1 // pred_region
      %s82 = ssub.s32 1536, 1536
      %83 = vsyncadd [#allocation11], %s82
      %s84 = sshll.u32 [#allocation10], 4
      %s85 = int_to_ptr.vmem [resolvable:$true] %s84
      %90 = dma.hbm_to_vmem [thread:$0]  %s5, 1536, %s85, [#allocation11], 128, 128, 8
    $region25: #{_step_impl.1} parent=1 // pred_fallthru
      _
    // Predicated region
    $region26: #{_step_impl.1} parent=1 // pred_check
      _
    $region27: #{_step_impl.1} parent=1 // pred_check_branch
      %92 = sbr.rel (0) target = $region29
    $region28: #{_step_impl.1} parent=1 // pred_region
      _
    $region29: #{_step_impl.1} parent=1 // pred_fallthru
      _
    // Predicated region
    $region30: #{_step_impl.1} parent=1 // pred_check
      _
    $region31: #{_step_impl.1} parent=1 // pred_check_branch
      %94 = sbr.rel (0) target = $region33
    $region32: #{_step_impl.1} parent=1 // pred_region
      %s96 = ssub.s32 1024, 1024
      %97 = vsyncadd [#allocation11], %s96
      %s98 = sshll.u32 [#allocation12], 4
      %s99 = int_to_ptr.vmem [resolvable:$true] %s98
      %104 = dma.hbm_to_vmem [thread:$0]  %s7, 1024, %s99, [#allocation11], 128, 128, 8
    $region33: #{_step_impl.1} parent=1 // pred_fallthru
      _
    // Predicated region
    $region34: #{_step_impl.1} parent=1 // pred_check
      _
    $region35: #{_step_impl.1} parent=1 // pred_check_branch
      %106 = sbr.rel (0) target = $region37
    $region36: #{_step_impl.1} parent=1 // pred_region
      _
    $region37: #{_step_impl.1} parent=1 // pred_fallthru
      _
    // Predicated region
    $region38: #{_step_impl.1} parent=1 // pred_check
      _
    $region39: #{_step_impl.1} parent=1 // pred_check_branch
      %108 = sbr.rel (0) target = $region41
    $region40: #{_step_impl.1} parent=1 // pred_region
      %s110 = ssub.s32 2048, 2048
      %111 = vsyncadd [#allocation14], %s110
      %s112 = sshll.u32 [#allocation13], 4
      %s113 = int_to_ptr.vmem [resolvable:$true] %s112
      %118 = dma.hbm_to_vmem [thread:$0]  %s9, 2048, %s113, [#allocation14], 128, 128, 8
    $region41: #{_step_impl.1} parent=1 // pred_fallthru
      _
    // Predicated region
    $region42: #{_step_impl.1} parent=1 // pred_check
      _
    $region43: #{_step_impl.1} parent=1 // pred_check_branch
      %120 = sbr.rel (0) target = $region45
    $region44: #{_step_impl.1} parent=1 // pred_region
      _
    $region45: #{_step_impl.1} parent=1 // pred_fallthru
      _
    // Predicated region
    $region46: #{_step_impl.1} parent=1 // pred_check
      _
    $region47: #{_step_impl.1} parent=1 // pred_check_branch
      %122 = sbr.rel (0) target = $region49
    $region48: #{_step_impl.1} parent=1 // pred_region
      %123 = dma.done [#allocation3], 64
    $region49: #{_step_impl.1} parent=1 // pred_fallthru
      _
    // Predicated region
    $region50: #{_step_impl.1} parent=1 // pred_check
      _
    $region51: #{_step_impl.1} parent=1 // pred_check_branch
      %125 = sbr.rel (0) target = $region53
    $region52: #{_step_impl.1} parent=1 // pred_region
      %126 = dma.done [#allocation5], 32
    $region53: #{_step_impl.1} parent=1 // pred_fallthru
      _
    // Predicated region
    $region54: #{_step_impl.1} parent=1 // pred_check
      _
    $region55: #{_step_impl.1} parent=1 // pred_check_branch
      %128 = sbr.rel (0) target = $region57
    $region56: #{_step_impl.1} parent=1 // pred_region
      %129 = dma.done [#allocation5], 256
    $region57: #{_step_impl.1} parent=1 // pred_fallthru
      _
    // Predicated region
    $region58: #{_step_impl.1} parent=1 // pred_check
      _
    $region59: #{_step_impl.1} parent=1 // pred_check_branch
      %131 = sbr.rel (0) target = $region61
    $region60: #{_step_impl.1} parent=1 // pred_region
      %132 = dma.done [#allocation8], 256
    $region61: #{_step_impl.1} parent=1 // pred_fallthru
      _
    // Predicated region
    $region62: #{_step_impl.1} parent=1 // pred_check
      _
    $region63: #{_step_impl.1} parent=1 // pred_check_branch
      %134 = sbr.rel (0) target = $region65
    $region64: #{_step_impl.1} parent=1 // pred_region
      %135 = dma.done [#allocation8], 1536
    $region65: #{_step_impl.1} parent=1 // pred_fallthru
      _
    // Predicated region
    $region66: #{_step_impl.1} parent=1 // pred_check
      _
    $region67: #{_step_impl.1} parent=1 // pred_check_branch
      %137 = sbr.rel (0) target = $region69
    $region68: #{_step_impl.1} parent=1 // pred_region
      %138 = dma.done [#allocation11], 1536
    $region69: #{_step_impl.1} parent=1 // pred_fallthru
      _
    // Predicated region
    $region70: #{_step_impl.1} parent=1 // pred_check
      _
    $region71: #{_step_impl.1} parent=1 // pred_check_branch
      %140 = sbr.rel (0) target = $region73
    $region72: #{_step_impl.1} parent=1 // pred_region
      %141 = dma.done [#allocation11], 1024
    $region73: #{_step_impl.1} parent=1 // pred_fallthru
      _
    // Predicated region
    $region74: #{_step_impl.1} parent=1 // pred_check
      _
    $region75: #{_step_impl.1} parent=1 // pred_check_branch
      %143 = sbr.rel (0) target = $region77
    $region76: #{_step_impl.1} parent=1 // pred_region
      %144 = dma.done [#allocation14], 2048
    $region77: #{_step_impl.1} parent=1 // pred_fallthru
      _
    %v145 = vld [vmem:[#allocation4] sm:$0x3]
    %v146 = vld [vmem:[#allocation2] sm:$0x3]
    %s147 = scalar_lea.vmem [#allocation2], 2
    %v148 = vld [vmem:[%s147] sm:$0x3]
    %150 = vrot.lane.b32.xlu0 %v148, 32
    %v151 = vpop.permute.xlu0 %150
    %154 = vrot.lane.b32.xlu0 %v145, 64
    %v155 = vpop.permute.xlu0 %154
    %vm157 = vcmask 261120
    %v158 = vsel %vm157, %v146, %v151
    %vm159 = vcmask 523264
    %v160 = vsel %vm159, %v158, %v155
    %v161 = vld [vmem:[#allocation9] sm:$0xff]
    %v162 = vld [vmem:[#allocation9 + $0x8] sm:$0xff]
    %v163 = vld [vmem:[#allocation9 + $0x10] sm:$0xff]
    %v164 = vld [vmem:[#allocation9 + $0x18] sm:$0xff]
    %v165 = vld [vmem:[#allocation9 + $0x20] sm:$0xff]
    %v166 = vld [vmem:[#allocation9 + $0x28] sm:$0xff]
    %v167 = vld [vmem:[#allocation9 + $0x30] sm:$0xff]
    %v168 = vld [vmem:[#allocation9 + $0x38] sm:$0xff]
    %v169 = vld [vmem:[#allocation9 + $0x40] sm:$0xff]
    %v170 = vld [vmem:[#allocation9 + $0x48] sm:$0xff]
    %v171 = vld [vmem:[#allocation9 + $0x50] sm:$0xff]
    %v172 = vld [vmem:[#allocation9 + $0x58] sm:$0xff]
    %vm173 = vcmask 785408
    %v175 = vsel %vm173, %v160, 0
    %177 = vmatprep.subr.mxu0 0.0
    %178 = vmatpush1.msra.mxu0 0.0
    %179 = vmatprep.subr.mxu0 0.0
    %180 = vmatpush1.msra.mxu0 0.0
    %181 = vmatprep.subr.mxu0 0.0
    %182 = vmatpush1.msra.mxu0 0.0
    %183 = vmatprep.subr.mxu0 0.0
    %184 = vmatpush1.msra.mxu0 0.0
    %185 = vmatprep.subr.mxu0 0.0
    %186 = vmatpush1.msra.mxu0 %v172
    %187 = vmatprep.subr.mxu0 0.0
    %188 = vmatpush1.msra.mxu0 %v171
    %189 = vmatprep.subr.mxu0 0.0
    %190 = vmatpush1.msra.mxu0 %v170
    %191 = vmatprep.subr.mxu0 0.0
    %192 = vmatpush1.msra.mxu0 %v169
    %193 = vmatprep.subr.mxu0 0.0
    %194 = vmatpush1.msra.mxu0 %v168
    %195 = vmatprep.subr.mxu0 0.0
    %196 = vmatpush1.msra.mxu0 %v167
    %197 = vmatprep.subr.mxu0 0.0
    %198 = vmatpush1.msra.mxu0 %v166
    %199 = vmatprep.subr.mxu0 0.0
    %200 = vmatpush1.msra.mxu0 %v165
    %201 = vmatprep.subr.mxu0 0.0
    %202 = vmatpush1.msra.mxu0 %v164
    %203 = vmatprep.subr.mxu0 0.0
    %204 = vmatpush1.msra.mxu0 %v163
    %205 = vmatprep.subr.mxu0 0.0
    %206 = vmatpush1.msra.mxu0 %v162
    %207 = vmatprep.subr.mxu0 0.0
    %208 = vmatpush1.msra.mxu0 %v161
    %209 = vmatprep.subr.mxu0 0.0
    %210 = vmatpush2.msra.mxu0 0.0
    %211 = vmatprep.subr.mxu0 0.0
    %212 = vmatpush2.msra.mxu0 0.0
    %213 = vmatprep.subr.mxu0 0.0
    %214 = vmatpush2.msra.mxu0 0.0
    %215 = vmatprep.subr.mxu0 0.0
    %216 = vmatpush2.msra.mxu0 0.0
    %217 = vmatprep.subr.mxu0 0.0
    %218 = vmatpush2.msra.mxu0 0.0
    %219 = vmatprep.subr.mxu0 0.0
    %220 = vmatpush2.msra.mxu0 0.0
    %221 = vmatprep.subr.mxu0 0.0
    %222 = vmatpush2.msra.mxu0 0.0
    %223 = vmatprep.subr.mxu0 0.0
    %224 = vmatpush2.msra.mxu0 0.0
    %225 = vmatprep.subr.mxu0 0.0
    %226 = vmatpush2.msra.mxu0 0.0
    %227 = vmatprep.subr.mxu0 0.0
    %228 = vmatpush2.msra.mxu0 0.0
    %229 = vmatprep.subr.mxu0 0.0
    %230 = vmatpush2.msra.mxu0 0.0
    %231 = vmatprep.subr.mxu0 0.0
    %232 = vmatpush2.msra.mxu0 0.0
    %233 = vmatprep.subr.mxu0 0.0
    %234 = vmatpush2.msra.mxu0 0.0
    %235 = vmatprep.subr.mxu0 0.0
    %236 = vmatpush2.msra.mxu0 0.0
    %237 = vmatprep.subr.mxu0 0.0
    %238 = vmatpush2.msra.mxu0 0.0
    %239 = vmatprep.subr.mxu0 0.0
    %240 = vmatpush2.msra.mxu0 0.0
    %241 = vmatprep.mubr.f32.mxu0 0.0
    %242 = vmatmul.mubr.f32.gmra.mxu0 %v175
    %v243 = vpop.f32.mrf.mxu0
    %v244 = vadd.f32 0.0, %v243
    %v245 = vpop.f32.mrf.mxu0
    %246 = vdwg.mxu0
    %v249 = vunpack.c.l.s4 1966171168
    %v250 = vunpack.c.0.s8 %v249
    %v251 = vlaneseq
    %v252 = vshrl.u32 %v251, 7
    %v253 = vsub.s32 %v250, %v252
    %v254 = vrot.slane %v244, %v253
    %v255 = vcombine.high %v254, %v254
    %v257 = vunpack.c.l.s4 1966171168
    %v258 = vunpack.c.0.s8 %v257
    %v259 = vlaneseq
    %v260 = vshrl.u32 %v259, 7
    %v261 = vsub.s32 %v258, %v260
    %v262 = vrot.slane %v254, %v261
    %v264 = vunpack.c.l.s4 1966171168
    %v265 = vunpack.c.0.s8 %v264
    %v266 = vlaneseq
    %v267 = vshrl.u32 %v266, 7
    %v268 = vsub.s32 %v265, %v267
    %v269 = vrot.slane %v255, %v268
    %v270 = vld [vmem:[#allocation6] sm:$0xff]
    %v271 = vld [vmem:[#allocation6 + $0x8] sm:$0xff]
    %v272 = vsel %vm157, %v262, 0
    %v275 = vsel %vm157, %v270, 0
    %277 = vmatprep.subr.mxu0 0.0
    %278 = vmatpush1.xpose.msra.mxu0 0.0
    %279 = vmatprep.subr.mxu0 0.0
    %280 = vmatpush1.xpose.msra.mxu0 0.0
    %281 = vmatprep.subr.mxu0 0.0
    %282 = vmatpush1.xpose.msra.mxu0 0.0
    %283 = vmatprep.subr.mxu0 0.0
    %284 = vmatpush1.xpose.msra.mxu0 0.0
    %285 = vmatprep.subr.mxu0 0.0
    %286 = vmatpush1.xpose.msra.mxu0 0.0
    %287 = vmatprep.subr.mxu0 0.0
    %288 = vmatpush1.xpose.msra.mxu0 0.0
    %289 = vmatprep.subr.mxu0 0.0
    %290 = vmatpush1.xpose.msra.mxu0 0.0
    %291 = vmatprep.subr.mxu0 0.0
    %292 = vmatpush1.xpose.msra.mxu0 0.0
    %293 = vmatprep.subr.mxu0 0.0
    %294 = vmatpush1.xpose.msra.mxu0 0.0
    %295 = vmatprep.subr.mxu0 0.0
    %296 = vmatpush1.xpose.msra.mxu0 0.0
    %297 = vmatprep.subr.mxu0 0.0
    %298 = vmatpush1.xpose.msra.mxu0 0.0
    %299 = vmatprep.subr.mxu0 0.0
    %300 = vmatpush1.xpose.msra.mxu0 0.0
    %301 = vmatprep.subr.mxu0 0.0
    %302 = vmatpush1.xpose.msra.mxu0 0.0
    %303 = vmatprep.subr.mxu0 0.0
    %304 = vmatpush1.xpose.msra.mxu0 0.0
    %305 = vmatprep.subr.mxu0 0.0
    %306 = vmatpush1.xpose.msra.mxu0 0.0
    %307 = vmatprep.subr.mxu0 0.0
    %308 = vmatpush1.xpose.msra.mxu0 %v275
    %309 = vmatprep.subr.mxu0 0.0
    %310 = vmatpush2.xpose.msra.mxu0 0.0
    %311 = vmatprep.subr.mxu0 0.0
    %312 = vmatpush2.xpose.msra.mxu0 0.0
    %313 = vmatprep.subr.mxu0 0.0
    %314 = vmatpush2.xpose.msra.mxu0 0.0
    %315 = vmatprep.subr.mxu0 0.0
    %316 = vmatpush2.xpose.msra.mxu0 0.0
    %317 = vmatprep.subr.mxu0 0.0
    %318 = vmatpush2.xpose.msra.mxu0 0.0
    %319 = vmatprep.subr.mxu0 0.0
    %320 = vmatpush2.xpose.msra.mxu0 0.0
    %321 = vmatprep.subr.mxu0 0.0
    %322 = vmatpush2.xpose.msra.mxu0 0.0
    %323 = vmatprep.subr.mxu0 0.0
    %324 = vmatpush2.xpose.msra.mxu0 0.0
    %325 = vmatprep.subr.mxu0 0.0
    %326 = vmatpush2.xpose.msra.mxu0 0.0
    %327 = vmatprep.subr.mxu0 0.0
    %328 = vmatpush2.xpose.msra.mxu0 0.0
    %329 = vmatprep.subr.mxu0 0.0
    %330 = vmatpush2.xpose.msra.mxu0 0.0
    %331 = vmatprep.subr.mxu0 0.0
    %332 = vmatpush2.xpose.msra.mxu0 0.0
    %333 = vmatprep.subr.mxu0 0.0
    %334 = vmatpush2.xpose.msra.mxu0 0.0
    %335 = vmatprep.subr.mxu0 0.0
    %336 = vmatpush2.xpose.msra.mxu0 0.0
    %337 = vmatprep.subr.mxu0 0.0
    %338 = vmatpush2.xpose.msra.mxu0 0.0
    %339 = vmatprep.subr.mxu0 0.0
    %340 = vmatpush2.xpose.msra.mxu0 0.0
    %341 = vmatprep.mubr.f32.mxu0 0.0
    %342 = vmatmul.mubr.f32.gmra.mxu0 %v272
    %v343 = vpop.f32.mrf.mxu0
    %v344 = vadd.f32 0.0, %v343
    %v345 = vpop.f32.mrf.mxu0
    %346 = vdwg.mxu0
    %v347 = vsel %vm157, %v269, 0
    %v350 = vsel %vm157, %v271, 0
    %352 = vmatprep.subr.mxu0 0.0
    %353 = vmatpush1.xpose.msra.mxu0 0.0
    %354 = vmatprep.subr.mxu0 0.0
    %355 = vmatpush1.xpose.msra.mxu0 0.0
    %356 = vmatprep.subr.mxu0 0.0
    %357 = vmatpush1.xpose.msra.mxu0 0.0
    %358 = vmatprep.subr.mxu0 0.0
    %359 = vmatpush1.xpose.msra.mxu0 0.0
    %360 = vmatprep.subr.mxu0 0.0
    %361 = vmatpush1.xpose.msra.mxu0 0.0
    %362 = vmatprep.subr.mxu0 0.0
    %363 = vmatpush1.xpose.msra.mxu0 0.0
    %364 = vmatprep.subr.mxu0 0.0
    %365 = vmatpush1.xpose.msra.mxu0 0.0
    %366 = vmatprep.subr.mxu0 0.0
    %367 = vmatpush1.xpose.msra.mxu0 0.0
    %368 = vmatprep.subr.mxu0 0.0
    %369 = vmatpush1.xpose.msra.mxu0 0.0
    %370 = vmatprep.subr.mxu0 0.0
    %371 = vmatpush1.xpose.msra.mxu0 0.0
    %372 = vmatprep.subr.mxu0 0.0
    %373 = vmatpush1.xpose.msra.mxu0 0.0
    %374 = vmatprep.subr.mxu0 0.0
    %375 = vmatpush1.xpose.msra.mxu0 0.0
    %376 = vmatprep.subr.mxu0 0.0
    %377 = vmatpush1.xpose.msra.mxu0 0.0
    %378 = vmatprep.subr.mxu0 0.0
    %379 = vmatpush1.xpose.msra.mxu0 0.0
    %380 = vmatprep.subr.mxu0 0.0
    %381 = vmatpush1.xpose.msra.mxu0 0.0
    %382 = vmatprep.subr.mxu0 0.0
    %383 = vmatpush1.xpose.msra.mxu0 %v350
    %384 = vmatprep.subr.mxu0 0.0
    %385 = vmatpush2.xpose.msra.mxu0 0.0
    %386 = vmatprep.subr.mxu0 0.0
    %387 = vmatpush2.xpose.msra.mxu0 0.0
    %388 = vmatprep.subr.mxu0 0.0
    %389 = vmatpush2.xpose.msra.mxu0 0.0
    %390 = vmatprep.subr.mxu0 0.0
    %391 = vmatpush2.xpose.msra.mxu0 0.0
    %392 = vmatprep.subr.mxu0 0.0
    %393 = vmatpush2.xpose.msra.mxu0 0.0
    %394 = vmatprep.subr.mxu0 0.0
    %395 = vmatpush2.xpose.msra.mxu0 0.0
    %396 = vmatprep.subr.mxu0 0.0
    %397 = vmatpush2.xpose.msra.mxu0 0.0
    %398 = vmatprep.subr.mxu0 0.0
    %399 = vmatpush2.xpose.msra.mxu0 0.0
    %400 = vmatprep.subr.mxu0 0.0
    %401 = vmatpush2.xpose.msra.mxu0 0.0
    %402 = vmatprep.subr.mxu0 0.0
    %403 = vmatpush2.xpose.msra.mxu0 0.0
    %404 = vmatprep.subr.mxu0 0.0
    %405 = vmatpush2.xpose.msra.mxu0 0.0
    %406 = vmatprep.subr.mxu0 0.0
    %407 = vmatpush2.xpose.msra.mxu0 0.0
    %408 = vmatprep.subr.mxu0 0.0
    %409 = vmatpush2.xpose.msra.mxu0 0.0
    %410 = vmatprep.subr.mxu0 0.0
    %411 = vmatpush2.xpose.msra.mxu0 0.0
    %412 = vmatprep.subr.mxu0 0.0
    %413 = vmatpush2.xpose.msra.mxu0 0.0
    %414 = vmatprep.subr.mxu0 0.0
    %415 = vmatpush2.xpose.msra.mxu0 0.0
    %416 = vmatprep.mubr.f32.mxu0 0.0
    %417 = vmatmul.mubr.f32.gmra.mxu0 %v347
    %v418 = vpop.f32.mrf.mxu0
    %v419 = vadd.f32 0.0, %v418
    %v420 = vpop.f32.mrf.mxu0
    %421 = vdwg.mxu0
    %vm422 = vcmask 57344
    %v423 = vsel %vm422, %v344, -inf
    %424 = vmax.xlane.f32.xlu0 %v423
    %v425 = vpop.xlane.xlu0 %424
    %v426 = vsel %vm422, %v419, -inf
    %427 = vmax.xlane.f32.xlu0 %v426
    %v428 = vpop.xlane.xlu0 %427
    %v429 = vsub.f32 %v344, %v425
    %v430 = vsub.f32 %v419, %v428
    %v431 = vmul.f32 %v429, 1.442695
    %v432 = vpow.pop %v431
    %v433 = vmul.f32 %v430, 1.442695
    %v434 = vpow.pop %v433
    %v435 = vsel %vm422, %v432, 0.0
    %436 = vadd.xlane.f32.xlu0 %v435
    %v437 = vpop.xlane.xlu0 %436
    %v438 = vsel %vm422, %v434, 0.0
    %439 = vadd.xlane.f32.xlu0 %v438
    %v440 = vpop.xlane.xlu0 %439
    %v441 = vrcp.pop %v437
    %v442 = vrcp.pop %v440
    %v443 = vmul.f32 %v432, %v441
    %v444 = vmul.f32 %v434, %v442
    %v445 = vld [vmem:[#allocation7] sm:$0xff]
    %v446 = vld [vmem:[#allocation7 + $0x8] sm:$0xff]
    %vm447 = vcmask 64512
    %v449 = vsel %vm447, %v443, 0
    %451 = vmatprep.subr.mxu0 0.0
    %452 = vmatpush1.msra.mxu0 0.0
    %453 = vmatprep.subr.mxu0 0.0
    %454 = vmatpush1.msra.mxu0 0.0
    %455 = vmatprep.subr.mxu0 0.0
    %456 = vmatpush1.msra.mxu0 0.0
    %457 = vmatprep.subr.mxu0 0.0
    %458 = vmatpush1.msra.mxu0 0.0
    %459 = vmatprep.subr.mxu0 0.0
    %460 = vmatpush1.msra.mxu0 0.0
    %461 = vmatprep.subr.mxu0 0.0
    %462 = vmatpush1.msra.mxu0 0.0
    %463 = vmatprep.subr.mxu0 0.0
    %464 = vmatpush1.msra.mxu0 0.0
    %465 = vmatprep.subr.mxu0 0.0
    %466 = vmatpush1.msra.mxu0 0.0
    %467 = vmatprep.subr.mxu0 0.0
    %468 = vmatpush1.msra.mxu0 0.0
    %469 = vmatprep.subr.mxu0 0.0
    %470 = vmatpush1.msra.mxu0 0.0
    %471 = vmatprep.subr.mxu0 0.0
    %472 = vmatpush1.msra.mxu0 0.0
    %473 = vmatprep.subr.mxu0 0.0
    %474 = vmatpush1.msra.mxu0 0.0
    %475 = vmatprep.subr.mxu0 0.0
    %476 = vmatpush1.msra.mxu0 0.0
    %477 = vmatprep.subr.mxu0 0.0
    %478 = vmatpush1.msra.mxu0 0.0
    %479 = vmatprep.subr.mxu0 0.0
    %480 = vmatpush1.msra.mxu0 0.0
    %481 = vmatprep.subr.mxu0 0.0
    %482 = vmatpush1.msra.mxu0 %v445
    %483 = vmatprep.subr.mxu0 0.0
    %484 = vmatpush2.msra.mxu0 0.0
    %485 = vmatprep.subr.mxu0 0.0
    %486 = vmatpush2.msra.mxu0 0.0
    %487 = vmatprep.subr.mxu0 0.0
    %488 = vmatpush2.msra.mxu0 0.0
    %489 = vmatprep.subr.mxu0 0.0
    %490 = vmatpush2.msra.mxu0 0.0
    %491 = vmatprep.subr.mxu0 0.0
    %492 = vmatpush2.msra.mxu0 0.0
    %493 = vmatprep.subr.mxu0 0.0
    %494 = vmatpush2.msra.mxu0 0.0
    %495 = vmatprep.subr.mxu0 0.0
    %496 = vmatpush2.msra.mxu0 0.0
    %497 = vmatprep.subr.mxu0 0.0
    %498 = vmatpush2.msra.mxu0 0.0
    %499 = vmatprep.subr.mxu0 0.0
    %500 = vmatpush2.msra.mxu0 0.0
    %501 = vmatprep.subr.mxu0 0.0
    %502 = vmatpush2.msra.mxu0 0.0
    %503 = vmatprep.subr.mxu0 0.0
    %504 = vmatpush2.msra.mxu0 0.0
    %505 = vmatprep.subr.mxu0 0.0
    %506 = vmatpush2.msra.mxu0 0.0
    %507 = vmatprep.subr.mxu0 0.0
    %508 = vmatpush2.msra.mxu0 0.0
    %509 = vmatprep.subr.mxu0 0.0
    %510 = vmatpush2.msra.mxu0 0.0
    %511 = vmatprep.subr.mxu0 0.0
    %512 = vmatpush2.msra.mxu0 0.0
    %513 = vmatprep.subr.mxu0 0.0
    %514 = vmatpush2.msra.mxu0 0.0
    %515 = vmatprep.mubr.f32.mxu0 0.0
    %516 = vmatmul.mubr.f32.gmra.mxu0 %v449
    %v517 = vpop.f32.mrf.mxu0
    %v518 = vadd.f32 0.0, %v517
    %v519 = vpop.f32.mrf.mxu0
    %520 = vdwg.mxu0
    %v522 = vsel %vm447, %v444, 0
    %524 = vmatprep.subr.mxu0 0.0
    %525 = vmatpush1.msra.mxu0 0.0
    %526 = vmatprep.subr.mxu0 0.0
    %527 = vmatpush1.msra.mxu0 0.0
    %528 = vmatprep.subr.mxu0 0.0
    %529 = vmatpush1.msra.mxu0 0.0
    %530 = vmatprep.subr.mxu0 0.0
    %531 = vmatpush1.msra.mxu0 0.0
    %532 = vmatprep.subr.mxu0 0.0
    %533 = vmatpush1.msra.mxu0 0.0
    %534 = vmatprep.subr.mxu0 0.0
    %535 = vmatpush1.msra.mxu0 0.0
    %536 = vmatprep.subr.mxu0 0.0
    %537 = vmatpush1.msra.mxu0 0.0
    %538 = vmatprep.subr.mxu0 0.0
    %539 = vmatpush1.msra.mxu0 0.0
    %540 = vmatprep.subr.mxu0 0.0
    %541 = vmatpush1.msra.mxu0 0.0
    %542 = vmatprep.subr.mxu0 0.0
    %543 = vmatpush1.msra.mxu0 0.0
    %544 = vmatprep.subr.mxu0 0.0
    %545 = vmatpush1.msra.mxu0 0.0
    %546 = vmatprep.subr.mxu0 0.0
    %547 = vmatpush1.msra.mxu0 0.0
    %548 = vmatprep.subr.mxu0 0.0
    %549 = vmatpush1.msra.mxu0 0.0
    %550 = vmatprep.subr.mxu0 0.0
    %551 = vmatpush1.msra.mxu0 0.0
    %552 = vmatprep.subr.mxu0 0.0
    %553 = vmatpush1.msra.mxu0 0.0
    %554 = vmatprep.subr.mxu0 0.0
    %555 = vmatpush1.msra.mxu0 %v446
    %556 = vmatprep.subr.mxu0 0.0
    %557 = vmatpush2.msra.mxu0 0.0
    %558 = vmatprep.subr.mxu0 0.0
    %559 = vmatpush2.msra.mxu0 0.0
    %560 = vmatprep.subr.mxu0 0.0
    %561 = vmatpush2.msra.mxu0 0.0
    %562 = vmatprep.subr.mxu0 0.0
    %563 = vmatpush2.msra.mxu0 0.0
    %564 = vmatprep.subr.mxu0 0.0
    %565 = vmatpush2.msra.mxu0 0.0
    %566 = vmatprep.subr.mxu0 0.0
    %567 = vmatpush2.msra.mxu0 0.0
    %568 = vmatprep.subr.mxu0 0.0
    %569 = vmatpush2.msra.mxu0 0.0
    %570 = vmatprep.subr.mxu0 0.0
    %571 = vmatpush2.msra.mxu0 0.0
    %572 = vmatprep.subr.mxu0 0.0
    %573 = vmatpush2.msra.mxu0 0.0
    %574 = vmatprep.subr.mxu0 0.0
    %575 = vmatpush2.msra.mxu0 0.0
    %576 = vmatprep.subr.mxu0 0.0
    %577 = vmatpush2.msra.mxu0 0.0
    %578 = vmatprep.subr.mxu0 0.0
    %579 = vmatpush2.msra.mxu0 0.0
    %580 = vmatprep.subr.mxu0 0.0
    %581 = vmatpush2.msra.mxu0 0.0
    %582 = vmatprep.subr.mxu0 0.0
    %583 = vmatpush2.msra.mxu0 0.0
    %584 = vmatprep.subr.mxu0 0.0
    %585 = vmatpush2.msra.mxu0 0.0
    %586 = vmatprep.subr.mxu0 0.0
    %587 = vmatpush2.msra.mxu0 0.0
    %588 = vmatprep.mubr.f32.mxu0 0.0
    %589 = vmatmul.mubr.f32.gmra.mxu0 %v522
    %v590 = vpop.f32.mrf.mxu0
    %v591 = vadd.f32 0.0, %v590
    %v592 = vpop.f32.mrf.mxu0
    %593 = vdwg.mxu0
    %v596 = vrot.slane %v591, 7
    %vm597 = vcmask 1041409
    %v598 = vsel %vm597, %v596, %v518
    %599 = vrot.lane.b32.xlu0 %v598, 32
    %v600 = vpop.permute.xlu0 %599
    %v602 = vsel %vm157, %v145, %v600
    %604 = vrot.lane.b32.xlu0 %v146, 64
    %v605 = vpop.permute.xlu0 %604
    %v607 = vsel %vm159, %v602, %v605
    %v608 = vld [vmem:[#allocation10] sm:$0xff]
    %v609 = vld [vmem:[#allocation10 + $0x8] sm:$0xff]
    %v610 = vld [vmem:[#allocation10 + $0x10] sm:$0xff]
    %v611 = vld [vmem:[#allocation10 + $0x18] sm:$0xff]
    %v612 = vld [vmem:[#allocation10 + $0x20] sm:$0xff]
    %v613 = vld [vmem:[#allocation10 + $0x28] sm:$0xff]
    %v614 = vld [vmem:[#allocation10 + $0x30] sm:$0xff]
    %v615 = vld [vmem:[#allocation10 + $0x38] sm:$0xff]
    %v616 = vld [vmem:[#allocation10 + $0x40] sm:$0xff]
    %v617 = vld [vmem:[#allocation10 + $0x48] sm:$0xff]
    %v618 = vld [vmem:[#allocation10 + $0x50] sm:$0xff]
    %v619 = vld [vmem:[#allocation10 + $0x58] sm:$0xff]
    %v620 = vld [vmem:[%s6] sm:$0x1]
    %v622 = vlaneseq
    %v623 = vshrl.u32 %v622, 7
    %v624 = vsub.s32 0, %v623
    %v625 = vrot.slane %v620, %v624
    %v628 = vsel %vm173, %v607, 0
    %630 = vmatprep.subr.mxu0 0.0
    %631 = vmatpush1.msra.mxu0 0.0
    %632 = vmatprep.subr.mxu0 0.0
    %633 = vmatpush1.msra.mxu0 0.0
    %634 = vmatprep.subr.mxu0 0.0
    %635 = vmatpush1.msra.mxu0 0.0
    %636 = vmatprep.subr.mxu0 0.0
    %637 = vmatpush1.msra.mxu0 0.0
    %638 = vmatprep.subr.mxu0 0.0
    %639 = vmatpush1.msra.mxu0 %v619
    %640 = vmatprep.subr.mxu0 0.0
    %641 = vmatpush1.msra.mxu0 %v618
    %642 = vmatprep.subr.mxu0 0.0
    %643 = vmatpush1.msra.mxu0 %v617
    %644 = vmatprep.subr.mxu0 0.0
    %645 = vmatpush1.msra.mxu0 %v616
    %646 = vmatprep.subr.mxu0 0.0
    %647 = vmatpush1.msra.mxu0 %v615
    %648 = vmatprep.subr.mxu0 0.0
    %649 = vmatpush1.msra.mxu0 %v614
    %650 = vmatprep.subr.mxu0 0.0
    %651 = vmatpush1.msra.mxu0 %v613
    %652 = vmatprep.subr.mxu0 0.0
    %653 = vmatpush1.msra.mxu0 %v612
    %654 = vmatprep.subr.mxu0 0.0
    %655 = vmatpush1.msra.mxu0 %v611
    %656 = vmatprep.subr.mxu0 0.0
    %657 = vmatpush1.msra.mxu0 %v610
    %658 = vmatprep.subr.mxu0 0.0
    %659 = vmatpush1.msra.mxu0 %v609
    %660 = vmatprep.subr.mxu0 0.0
    %661 = vmatpush1.msra.mxu0 %v608
    %662 = vmatprep.subr.mxu0 0.0
    %663 = vmatpush2.msra.mxu0 0.0
    %664 = vmatprep.subr.mxu0 0.0
    %665 = vmatpush2.msra.mxu0 0.0
    %666 = vmatprep.subr.mxu0 0.0
    %667 = vmatpush2.msra.mxu0 0.0
    %668 = vmatprep.subr.mxu0 0.0
    %669 = vmatpush2.msra.mxu0 0.0
    %670 = vmatprep.subr.mxu0 0.0
    %671 = vmatpush2.msra.mxu0 0.0
    %672 = vmatprep.subr.mxu0 0.0
    %673 = vmatpush2.msra.mxu0 0.0
    %674 = vmatprep.subr.mxu0 0.0
    %675 = vmatpush2.msra.mxu0 0.0
    %676 = vmatprep.subr.mxu0 0.0
    %677 = vmatpush2.msra.mxu0 0.0
    %678 = vmatprep.subr.mxu0 0.0
    %679 = vmatpush2.msra.mxu0 0.0
    %680 = vmatprep.subr.mxu0 0.0
    %681 = vmatpush2.msra.mxu0 0.0
    %682 = vmatprep.subr.mxu0 0.0
    %683 = vmatpush2.msra.mxu0 0.0
    %684 = vmatprep.subr.mxu0 0.0
    %685 = vmatpush2.msra.mxu0 0.0
    %686 = vmatprep.subr.mxu0 0.0
    %687 = vmatpush2.msra.mxu0 0.0
    %688 = vmatprep.subr.mxu0 0.0
    %689 = vmatpush2.msra.mxu0 0.0
    %690 = vmatprep.subr.mxu0 0.0
    %691 = vmatpush2.msra.mxu0 0.0
    %692 = vmatprep.subr.mxu0 0.0
    %693 = vmatpush2.msra.mxu0 0.0
    %694 = vmatprep.mubr.f32.mxu0 0.0
    %695 = vmatmul.mubr.f32.gmra.mxu0 %v628
    %v696 = vpop.f32.mrf.mxu0
    %v697 = vadd.f32 %v625, %v696
    %v698 = vpop.f32.mrf.mxu0
    %699 = vdwg.mxu0
    %v700 = vxor.u32 %v697, 2147483648
    %v701 = vmul.f32 %v700, 1.442695
    %v702 = vpow.pop %v701
    %v703 = vadd.f32 %v702, 1.0
    %v704 = vrcp.pop %v703
    %v705 = vmul.f32 1.0, %v704
    %707 = vrot.lane.b32.xlu0 %v697, 32
    %v708 = vpop.permute.xlu0 %707
    %v710 = vmul.f32 %v705, %v708
    %712 = vrot.lane.b32.xlu0 %v710, 64
    %v713 = vpop.permute.xlu0 %712
    %v715 = vadd.f32 %v697, %v713
    %v716 = vtanh.pop %v715
    %v717 = vsub.f32 1.0, %v705
    %719 = vrot.lane.b32.xlu0 %v716, 96
    %v720 = vpop.permute.xlu0 %719
    %v722 = vmul.f32 %v717, %v720
    %723 = vrot.lane.b32.xlu0 %v146, 32
    %v724 = vpop.permute.xlu0 %723
    %v726 = vmul.f32 %v705, %v724
    %v727 = vadd.f32 %v722, %v726
    %729 = vrot.lane.b32.xlu0 %v727, 96
    %v730 = vpop.permute.xlu0 %729
    %v732 = vsel %vm157, %v730, %v151
    %v733 = vld [vmem:[#allocation12] sm:$0xff]
    %v734 = vld [vmem:[#allocation12 + $0x8] sm:$0xff]
    %v735 = vld [vmem:[#allocation12 + $0x10] sm:$0xff]
    %v736 = vld [vmem:[#allocation12 + $0x18] sm:$0xff]
    %v737 = vld [vmem:[#allocation12 + $0x20] sm:$0xff]
    %v738 = vld [vmem:[#allocation12 + $0x28] sm:$0xff]
    %v739 = vld [vmem:[#allocation12 + $0x30] sm:$0xff]
    %v740 = vld [vmem:[#allocation12 + $0x38] sm:$0xff]
    %v741 = vld [vmem:[%s8] sm:$0x1]
    %v743 = vlaneseq
    %v744 = vshrl.u32 %v743, 7
    %v745 = vsub.s32 0, %v744
    %v746 = vrot.slane %v741, %v745
    %v749 = vsel %vm159, %v732, 0
    %751 = vmatprep.subr.mxu0 0.0
    %752 = vmatpush1.msra.mxu0 0.0
    %753 = vmatprep.subr.mxu0 0.0
    %754 = vmatpush1.msra.mxu0 0.0
    %755 = vmatprep.subr.mxu0 0.0
    %756 = vmatpush1.msra.mxu0 0.0
    %757 = vmatprep.subr.mxu0 0.0
    %758 = vmatpush1.msra.mxu0 0.0
    %759 = vmatprep.subr.mxu0 0.0
    %760 = vmatpush1.msra.mxu0 0.0
    %761 = vmatprep.subr.mxu0 0.0
    %762 = vmatpush1.msra.mxu0 0.0
    %763 = vmatprep.subr.mxu0 0.0
    %764 = vmatpush1.msra.mxu0 0.0
    %765 = vmatprep.subr.mxu0 0.0
    %766 = vmatpush1.msra.mxu0 0.0
    %767 = vmatprep.subr.mxu0 0.0
    %768 = vmatpush1.msra.mxu0 %v740
    %769 = vmatprep.subr.mxu0 0.0
    %770 = vmatpush1.msra.mxu0 %v739
    %771 = vmatprep.subr.mxu0 0.0
    %772 = vmatpush1.msra.mxu0 %v738
    %773 = vmatprep.subr.mxu0 0.0
    %774 = vmatpush1.msra.mxu0 %v737
    %775 = vmatprep.subr.mxu0 0.0
    %776 = vmatpush1.msra.mxu0 %v736
    %777 = vmatprep.subr.mxu0 0.0
    %778 = vmatpush1.msra.mxu0 %v735
    %779 = vmatprep.subr.mxu0 0.0
    %780 = vmatpush1.msra.mxu0 %v734
    %781 = vmatprep.subr.mxu0 0.0
    %782 = vmatpush1.msra.mxu0 %v733
    %783 = vmatprep.subr.mxu0 0.0
    %784 = vmatpush2.msra.mxu0 0.0
    %785 = vmatprep.subr.mxu0 0.0
    %786 = vmatpush2.msra.mxu0 0.0
    %787 = vmatprep.subr.mxu0 0.0
    %788 = vmatpush2.msra.mxu0 0.0
    %789 = vmatprep.subr.mxu0 0.0
    %790 = vmatpush2.msra.mxu0 0.0
    %791 = vmatprep.subr.mxu0 0.0
    %792 = vmatpush2.msra.mxu0 0.0
    %793 = vmatprep.subr.mxu0 0.0
    %794 = vmatpush2.msra.mxu0 0.0
    %795 = vmatprep.subr.mxu0 0.0
    %796 = vmatpush2.msra.mxu0 0.0
    %797 = vmatprep.subr.mxu0 0.0
    %798 = vmatpush2.msra.mxu0 0.0
    %799 = vmatprep.subr.mxu0 0.0
    %800 = vmatpush2.msra.mxu0 0.0
    %801 = vmatprep.subr.mxu0 0.0
    %802 = vmatpush2.msra.mxu0 0.0
    %803 = vmatprep.subr.mxu0 0.0
    %804 = vmatpush2.msra.mxu0 0.0
    %805 = vmatprep.subr.mxu0 0.0
    %806 = vmatpush2.msra.mxu0 0.0
    %807 = vmatprep.subr.mxu0 0.0
    %808 = vmatpush2.msra.mxu0 0.0
    %809 = vmatprep.subr.mxu0 0.0
    %810 = vmatpush2.msra.mxu0 0.0
    %811 = vmatprep.subr.mxu0 0.0
    %812 = vmatpush2.msra.mxu0 0.0
    %813 = vmatprep.subr.mxu0 0.0
    %814 = vmatpush2.msra.mxu0 0.0
    %815 = vmatprep.mubr.f32.mxu0 0.0
    %816 = vmatmul.mubr.f32.gmra.mxu0 %v749
    %v817 = vpop.f32.mrf.mxu0
    %v818 = vadd.f32 %v746, %v817
    %v819 = vpop.f32.mrf.mxu0
    %820 = vdwg.mxu0
    %v821 = vxor.u32 %v818, 2147483648
    %v822 = vmul.f32 %v821, 1.442695
    %v823 = vpow.pop %v822
    %v824 = vadd.f32 %v823, 1.0
    %v825 = vrcp.pop %v824
    %v826 = vmul.f32 1.0, %v825
    %828 = vrot.lane.b32.xlu0 %v818, 32
    %v829 = vpop.permute.xlu0 %828
    %v831 = vmul.f32 %v826, %v829
    %833 = vrot.lane.b32.xlu0 %v831, 64
    %v834 = vpop.permute.xlu0 %833
    %v836 = vadd.f32 %v818, %v834
    %v837 = vtanh.pop %v836
    %v838 = vsub.f32 1.0, %v826
    %840 = vrot.lane.b32.xlu0 %v837, 96
    %v841 = vpop.permute.xlu0 %840
    %v843 = vmul.f32 %v838, %v841
    %v844 = vmul.f32 %v826, %v151
    %v845 = vadd.f32 %v843, %v844
    %848 = vrot.lane.b32.xlu0 %v845, 32
    %v849 = vpop.permute.xlu0 %848
    %851 = vrot.lane.b32.xlu0 %v145, 96
    %v852 = vpop.permute.xlu0 %851
    %v854 = vsel %vm157, %v598, %v727
    %v855 = vsel %vm159, %v854, %v849
    %v856 = vsel %vm173, %v855, %v852
    %v857 = vld [vmem:[#allocation13] sm:$0xff]
    %v858 = vld [vmem:[#allocation13 + $0x8] sm:$0xff]
    %v859 = vld [vmem:[#allocation13 + $0x10] sm:$0xff]
    %v860 = vld [vmem:[#allocation13 + $0x18] sm:$0xff]
    %v861 = vld [vmem:[#allocation13 + $0x20] sm:$0xff]
    %v862 = vld [vmem:[#allocation13 + $0x28] sm:$0xff]
    %v863 = vld [vmem:[#allocation13 + $0x30] sm:$0xff]
    %v864 = vld [vmem:[#allocation13 + $0x38] sm:$0xff]
    %v865 = vld [vmem:[#allocation13 + $0x40] sm:$0xff]
    %v866 = vld [vmem:[#allocation13 + $0x48] sm:$0xff]
    %v867 = vld [vmem:[#allocation13 + $0x50] sm:$0xff]
    %v868 = vld [vmem:[#allocation13 + $0x58] sm:$0xff]
    %v869 = vld [vmem:[#allocation13 + $0x60] sm:$0xff]
    %v870 = vld [vmem:[#allocation13 + $0x68] sm:$0xff]
    %v871 = vld [vmem:[#allocation13 + $0x70] sm:$0xff]
    %v872 = vld [vmem:[#allocation13 + $0x78] sm:$0xff]
    %v873 = vld [vmem:[%s10] sm:$0x1]
    %v875 = vlaneseq
    %v876 = vshrl.u32 %v875, 7
    %v877 = vsub.s32 0, %v876
    %v878 = vrot.slane %v873, %v877
    %880 = vmatprep.subr.mxu0 0.0
    %881 = vmatpush1.msra.mxu0 %v872
    %882 = vmatprep.subr.mxu0 0.0
    %883 = vmatpush1.msra.mxu0 %v871
    %884 = vmatprep.subr.mxu0 0.0
    %885 = vmatpush1.msra.mxu0 %v870
    %886 = vmatprep.subr.mxu0 0.0
    %887 = vmatpush1.msra.mxu0 %v869
    %888 = vmatprep.subr.mxu0 0.0
    %889 = vmatpush1.msra.mxu0 %v868
    %890 = vmatprep.subr.mxu0 0.0
    %891 = vmatpush1.msra.mxu0 %v867
    %892 = vmatprep.subr.mxu0 0.0
    %893 = vmatpush1.msra.mxu0 %v866
    %894 = vmatprep.subr.mxu0 0.0
    %895 = vmatpush1.msra.mxu0 %v865
    %896 = vmatprep.subr.mxu0 0.0
    %897 = vmatpush1.msra.mxu0 %v864
    %898 = vmatprep.subr.mxu0 0.0
    %899 = vmatpush1.msra.mxu0 %v863
    %900 = vmatprep.subr.mxu0 0.0
    %901 = vmatpush1.msra.mxu0 %v862
    %902 = vmatprep.subr.mxu0 0.0
    %903 = vmatpush1.msra.mxu0 %v861
    %904 = vmatprep.subr.mxu0 0.0
    %905 = vmatpush1.msra.mxu0 %v860
    %906 = vmatprep.subr.mxu0 0.0
    %907 = vmatpush1.msra.mxu0 %v859
    %908 = vmatprep.subr.mxu0 0.0
    %909 = vmatpush1.msra.mxu0 %v858
    %910 = vmatprep.subr.mxu0 0.0
    %911 = vmatpush1.msra.mxu0 %v857
    %912 = vmatprep.subr.mxu0 0.0
    %913 = vmatpush2.msra.mxu0 0.0
    %914 = vmatprep.subr.mxu0 0.0
    %915 = vmatpush2.msra.mxu0 0.0
    %916 = vmatprep.subr.mxu0 0.0
    %917 = vmatpush2.msra.mxu0 0.0
    %918 = vmatprep.subr.mxu0 0.0
    %919 = vmatpush2.msra.mxu0 0.0
    %920 = vmatprep.subr.mxu0 0.0
    %921 = vmatpush2.msra.mxu0 0.0
    %922 = vmatprep.subr.mxu0 0.0
    %923 = vmatpush2.msra.mxu0 0.0
    %924 = vmatprep.subr.mxu0 0.0
    %925 = vmatpush2.msra.mxu0 0.0
    %926 = vmatprep.subr.mxu0 0.0
    %927 = vmatpush2.msra.mxu0 0.0
    %928 = vmatprep.subr.mxu0 0.0
    %929 = vmatpush2.msra.mxu0 0.0
    %930 = vmatprep.subr.mxu0 0.0
    %931 = vmatpush2.msra.mxu0 0.0
    %932 = vmatprep.subr.mxu0 0.0
    %933 = vmatpush2.msra.mxu0 0.0
    %934 = vmatprep.subr.mxu0 0.0
    %935 = vmatpush2.msra.mxu0 0.0
    %936 = vmatprep.subr.mxu0 0.0
    %937 = vmatpush2.msra.mxu0 0.0
    %938 = vmatprep.subr.mxu0 0.0
    %939 = vmatpush2.msra.mxu0 0.0
    %940 = vmatprep.subr.mxu0 0.0
    %941 = vmatpush2.msra.mxu0 0.0
    %942 = vmatprep.subr.mxu0 0.0
    %943 = vmatpush2.msra.mxu0 0.0
    %944 = vmatprep.mubr.f32.mxu0 0.0
    %945 = vmatmul.mubr.f32.gmra.mxu0 %v856
    %v946 = vpop.f32.mrf.mxu0
    %v947 = vadd.f32 %v878, %v946
    %v948 = vpop.f32.mrf.mxu0
    %949 = vdwg.mxu0
    %vm950 = vcmask 58368
    %v951 = vsel %vm950, %v947, -inf
    %952 = vmax.xlane.f32.xlu0 %v951
    %v953 = vpop.xlane.xlu0 %952
    %v954 = vsub.f32 %v947, %v953
    %v955 = vmul.f32 %v954, 1.442695
    %v956 = vpow.pop %v955
    %v957 = vsel %vm950, %v956, 0.0
    %958 = vadd.xlane.f32.xlu0 %v957
    %v959 = vpop.xlane.xlu0 %958
    %v960 = vrcp.pop %v959
    %v961 = vmul.f32 %v956, %v960
    %v962 = vsel %vm447, %v961, 0.0
    %v965 = vcombine.low %v856, %v962
    %v967 = vunpack.c.l.s4 1983009808
    %v968 = vunpack.c.0.s8 %v967
    %v969 = vlaneseq
    %v970 = vshrl.u32 %v969, 7
    %v971 = vsub.s32 %v968, %v970
    %v972 = vrot.slane %v965, %v971
    %974 = vst [vmem:[%s11] sm:$0xf] %v972
    // Predicated region
    $region78: #{_step_impl.1} parent=1 // pred_check
      _
    $region79: #{_step_impl.1} parent=1 // pred_check_branch
      %976 = sbr.rel (0) target = $region81
    $region80: #{_step_impl.1} parent=1 // pred_region
      _
    $region81: #{_step_impl.1} parent=1 // pred_fallthru
      _
    // Predicated region
    $region82: #{_step_impl.1} parent=1 // pred_check
      _
    $region83: #{_step_impl.1} parent=1 // pred_check_branch
      %978 = sbr.rel (0) target = $region85
    $region84: #{_step_impl.1} parent=1 // pred_region
      _
    $region85: #{_step_impl.1} parent=1 // pred_fallthru
      _
    %979 = vsyncpa [#allocation3], 1
    %980 = vsyncpa [#allocation5], 1
    %981 = vsyncpa [#allocation8], 1
    %982 = vsyncpa [#allocation11], 1
    %983 = vsyncpa [#allocation14], 1

</llo_original>
